<compile_context>
chip_gen: v5e
topology: v5e:2x2
jax: 0.10.0
libtpu: 0.0.40
codegen_flags: <defaults>
</compile_context>

<pallas_src>
import jax
import jax.numpy as jnp
from jax.experimental import pallas as pl
from jax.experimental.pallas import tpu as pltpu


def _add_pos_kernel(x_ref, pos_ref, o_ref):
    # x_ref / o_ref: (Bt, Lt) lane-dense tile of the flattened (B, S*D) input.
    # pos_ref:       (1, Lt) matching tile of the flattened positional slab.
    # (1, Lt) + (Bt, Lt) is a cheap sublane broadcast; pure VPU add.
    o_ref[...] = x_ref[...] + pos_ref[...]


def _largest_divisor_le(n: int, cap: int) -> int:
    """Largest divisor of n that is <= cap (n >= 1, cap >= 1)."""
    cap = min(cap, n)
    best = 1
    i = 1
    while i * i <= n:
        if n % i == 0:
            lo, hi = i, n // i
            if lo <= cap and lo > best:
                best = lo
            if hi <= cap and hi > best:
                best = hi
        i += 1
    return best


def _choose_tiles(B: int, L: int, itemsize: int):
    """Pick (Bt, Lt) tiles for the flattened (B, L) add.

    Lt: multiple of 128 dividing L (or L itself if L is not 128-aligned),
        capped at 64K lanes so a block stays a few MiB.
    Bt: multiple of the dtype sublane granule dividing B (or B itself),
        sized so Bt * Lt * itemsize ~= 2 MiB.
    """
    TARGET_BYTES = 2 * 1024 * 1024            # ~1-4 MiB blocks hit HBM roofline
    sub_granule = {4: 8, 2: 16, 1: 32}.get(itemsize, 8)

    if L % 128 == 0:
        lane_blocks = _largest_divisor_le(L // 128, 512)   # <= 65536 lanes/tile
        Lt = 128 * lane_blocks
    else:
        Lt = L                                 # full-dim block is always legal

    if B % sub_granule == 0:
        want_units = max(1, TARGET_BYTES // (Lt * itemsize * sub_granule))
        Bt = sub_granule * _largest_divisor_le(B // sub_granule, want_units)
    else:
        Bt = B                                 # full-dim block is always legal
    return Bt, Lt


def learned_positional_encoding(x, pos_embedding_table):
    """x: (B, S, D) float array. pos_embedding_table: (max_len, D)."""
    B, S, D = x.shape
    # arange(S) lookup == first S rows of the embedding table (wrapper glue).
    pos = pos_embedding_table[:S, :].astype(x.dtype)

    # Lane-dense flatten: last dim becomes S*D (a free reshape on contiguous rows).
    L = S * D
    x2 = x.reshape(B, L)
    pos2 = pos.reshape(1, L)

    itemsize = jnp.dtype(x.dtype).itemsize
    Bt, Lt = _choose_tiles(B, L, itemsize)
    grid = (B // Bt, L // Lt)

    out2 = pl.pallas_call(
        _add_pos_kernel,
        out_shape=jax.ShapeDtypeStruct((B, L), x.dtype),
        grid_spec=pltpu.PrefetchScalarGridSpec(
            num_scalar_prefetch=0,
            grid=grid,
            in_specs=[
                # x tile: (Bt, Lt) at block (i, j)
                pl.BlockSpec((Bt, Lt), lambda i, j: (i, j)),
                # pos tile: only the (1, Lt) slice for lane block j lives in VMEM
                # (never the whole slab), flat layout matches x exactly.
                pl.BlockSpec((1, Lt), lambda i, j: (0, j)),
            ],
            out_specs=pl.BlockSpec((Bt, Lt), lambda i, j: (i, j)),
        ),
        compiler_params=pltpu.CompilerParams(
            # Both axes are independent -> shard the grid across v7x's 2 TCs
            # (no effect on single-TC v5e/v6e).
            dimension_semantics=("parallel", "parallel"),
        ),
    )(x2, pos2)

    return out2.reshape(B, S, D)


if __name__ == "__main__":
    # Module config (matches the PyTorch defaults / a small forward).
    d_model = 32
    max_len = 500
    B, S = 2, 8

    key = jax.random.PRNGKey(0)
    k_x, k_emb = jax.random.split(key)

    # Deterministic parameter init (nn.Embedding(max_len, d_model) ~ N(0,1)).
    pos_embedding_table = jax.random.normal(k_emb, (max_len, d_model), dtype=jnp.float32)
    x = jax.random.normal(k_x, (B, S, d_model), dtype=jnp.float32)

    out = learned_positional_encoding(x, pos_embedding_table)
    out = jax.block_until_ready(out)

    ref = x + pos_embedding_table[:S][None, :, :]
    assert out.shape == (B, S, d_model)
    assert jnp.allclose(out, ref, atol=1e-6, rtol=1e-6)

    # Slightly larger shape to exercise the tiled multi-step path (grid > 1).
    B2, S2, D2 = 8, 512, 256
    k_x2, k_emb2 = jax.random.split(jax.random.PRNGKey(1))
    table2 = jax.random.normal(k_emb2, (1024, D2), dtype=jnp.float32)
    xb = jax.random.normal(k_x2, (B2, S2, D2), dtype=jnp.float32)
    out2 = jax.block_until_ready(learned_positional_encoding(xb, table2))
    ref2 = xb + table2[:S2][None, :, :]
    assert jnp.allclose(out2, ref2, atol=1e-6, rtol=1e-6)

    print("KERNEL_OK")
</pallas_src>

<mosaic_0001>
module attributes {stable_mosaic.version = 11 : i64} {
  func.func @_add_pos_kernel(%arg0: i32, %arg1: i32, %arg2: memref<2x256xf32, #tpu.memory_space<vmem>>, %arg3: memref<1x256xf32, #tpu.memory_space<vmem>>, %arg4: memref<2x256xf32, #tpu.memory_space<vmem>>) attributes {dimension_semantics = [#tpu.dimension_semantics<parallel>, #tpu.dimension_semantics<parallel>], iteration_bounds = array<i64: 1, 1>, scalar_prefetch = 0 : i64, scratch_operands = 0 : i64, tpu.core_type = #tpu.core_type<tc>, window_params = [{transform_indices = @transform_0, window_bounds = array<i64: 2, 256>}, {transform_indices = @transform_1, window_bounds = array<i64: 1, 256>}, {transform_indices = @transform_2, window_bounds = array<i64: 2, 256>}]} {
    %c0 = arith.constant 0 : index
    %c0_0 = arith.constant 0 : index
    %0 = vector.load %arg2[%c0, %c0_0] : memref<2x256xf32, #tpu.memory_space<vmem>>, vector<2x256xf32>
    %c0_1 = arith.constant 0 : index
    %c0_2 = arith.constant 0 : index
    %1 = vector.load %arg3[%c0_1, %c0_2] : memref<1x256xf32, #tpu.memory_space<vmem>>, vector<1x256xf32>
    %2 = vector.broadcast %1 : vector<1x256xf32> to vector<2x256xf32>
    %3 = arith.addf %0, %2 : vector<2x256xf32>
    %c0_3 = arith.constant 0 : index
    %c0_4 = arith.constant 0 : index
    %4 = vector.load %arg4[%c0_3, %c0_4] : memref<2x256xf32, #tpu.memory_space<vmem>>, vector<2x256xf32>
    tpu.vector_store %arg4[%c0_3, %c0_4], %3 {strides = array<i32>} : memref<2x256xf32, #tpu.memory_space<vmem>>, vector<2x256xf32>,
    return
  }
  func.func @transform_0(%arg0: i32, %arg1: i32) -> (i32, i32) {
    %c0_i32 = arith.constant 0 : i32
    return %arg0, %arg1 : i32, i32
  }
  func.func @transform_1(%arg0: i32, %arg1: i32) -> (i32, i32) {
    %c0_i32 = arith.constant 0 : i32
    %c0_i32_0 = arith.constant 0 : i32
    return %c0_i32, %arg1 : i32, i32
  }
  func.func @transform_2(%arg0: i32, %arg1: i32) -> (i32, i32) {
    %c0_i32 = arith.constant 0 : i32
    return %arg0, %arg1 : i32, i32
  }
}

</mosaic_0001>

<llo_original>
// kernel: tpu_custom_call.1
$region0: #{tpu_custom_call.1}
  #allocation0 [shape = 'u32[]', space=smem, size = 0x4, offset = 0x4, fixed_abs, tag = 'smem constant byte address 0x4 - core index']
  #allocation1 [shape = 'u32[72,128]{1,0:T(1,128)}', space=vmem, size = 0x9000, scoped, tag = 'internal scratch']
  %s0 = inlined_call_operand.hbm [shape: f32[2,256], index: 0, kind: input, shape index: {}]
  %s1 = inlined_call_operand.hbm [shape: f32[1,256], index: 1, kind: input, shape index: {}]
  %s2 = inlined_call_operand.hbm [shape: f32[2,256], index: 2, kind: output, shape index: {}]
  %s3 = sld [smem:[#allocation0]]
  $region26: #{tpu_custom_call.1} parent=0
    _
  %s5 = ssub.s32 1, %s3
  %s6 = scalar_select 0, %s5, %s3
  $region1: #{tpu_custom_call.1} parent=0
    #allocation2 [shape = 'u8[2048]{0}', space=vmem, size = 0x800, scoped, tag = 'input window, operand 0, single buffered']
    #allocation3 [shape = 's32[1]{0}', space=sflag, size = 0x4, scoped, tag = 'scoped memory for tpu_custom_call.1']
    #allocation4 [shape = 's32[1]{0}', space=sflag, size = 0x4, scoped, tag = 'scoped memory for tpu_custom_call.1']
    #allocation5 [shape = 'u8[1024]{0}', space=vmem, size = 0x400, scoped, tag = 'input window, operand 1, single buffered']
    #allocation6 [shape = 's32[1]{0}', space=sflag, size = 0x4, scoped, tag = 'scoped memory for tpu_custom_call.1']
    #allocation7 [shape = 'u8[2048]{0}', space=vmem, size = 0x800, scoped, tag = 'output window, operand 0, single buffered']
    %7 = vsyncpa [#allocation3], 0
    %8 = vsyncpa [#allocation6], 0
    %9 = vsyncpa [#allocation4], 0
    // Predicated region
    $region2: #{tpu_custom_call.1} parent=1 // pred_check
      _
    $region3: #{tpu_custom_call.1} parent=1 // pred_check_branch
      %11 = sbr.rel (0) target = $region5
    $region4: #{tpu_custom_call.1} parent=1 // pred_region
      %13 = vsyncadd [#allocation3], 0
      %s15 = sshll.u32 %s0, 4
      %s16 = int_to_ptr.hbm [resolvable:$true] %s15
      %s17 = sshll.u32 [#allocation2], 4
      %s18 = int_to_ptr.vmem [resolvable:$true] %s17
      %20 = dma.hbm_to_vmem [thread:$0]  %s16, 64, %s18, [#allocation3]
    $region5: #{tpu_custom_call.1} parent=1 // pred_fallthru
      _
    // Predicated region
    $region6: #{tpu_custom_call.1} parent=1 // pred_check
      _
    $region7: #{tpu_custom_call.1} parent=1 // pred_check_branch
      %22 = sbr.rel (0) target = $region9
    $region8: #{tpu_custom_call.1} parent=1 // pred_region
      %24 = vsyncadd [#allocation6], 0
      %s26 = sshll.u32 %s1, 4
      %s27 = int_to_ptr.hbm [resolvable:$true] %s26
      %s28 = sshll.u32 [#allocation5], 4
      %s29 = int_to_ptr.vmem [resolvable:$true] %s28
      %31 = dma.hbm_to_vmem [thread:$0]  %s27, 32, %s29, [#allocation6]
    $region9: #{tpu_custom_call.1} parent=1 // pred_fallthru
      _
    // Predicated region
    $region10: #{tpu_custom_call.1} parent=1 // pred_check
      _
    $region11: #{tpu_custom_call.1} parent=1 // pred_check_branch
      %33 = sbr.rel (0) target = $region13
    $region12: #{tpu_custom_call.1} parent=1 // pred_region
      %35 = dma.done [#allocation3], 64
    $region13: #{tpu_custom_call.1} parent=1 // pred_fallthru
      _
    // Predicated region
    $region14: #{tpu_custom_call.1} parent=1 // pred_check
      _
    $region15: #{tpu_custom_call.1} parent=1 // pred_check_branch
      %37 = sbr.rel (0) target = $region17
    $region16: #{tpu_custom_call.1} parent=1 // pred_region
      %39 = dma.done [#allocation6], 32
    $region17: #{tpu_custom_call.1} parent=1 // pred_fallthru
      _
    %v40 = vld [vmem:[#allocation2] sm:$0xf]
    %v41 = vld [vmem:[#allocation5] sm:$0x3]
    %v43 = vperm.slane %v41, 0
    %v44 = vperm.slane %v41, 1
    %v45 = vrot.slane %v44, 6
    %vm46 = vcmask 1041408
    %v47 = vsel %vm46, %v43, %v45
    %v49 = vadd.f32 %v40, %v47
    %50 = vst [vmem:[#allocation7] sm:$0xf] %v49
    // Predicated region
    $region18: #{tpu_custom_call.1} parent=1 // pred_check
      _
    $region19: #{tpu_custom_call.1} parent=1 // pred_check_branch
      %52 = sbr.rel (0) target = $region21
    $region20: #{tpu_custom_call.1} parent=1 // pred_region
      %54 = vsyncadd [#allocation4], 0
      %s56 = sshll.u32 [#allocation7], 4
      %s57 = int_to_ptr.vmem [resolvable:$true] %s56
      %s58 = sshll.u32 %s2, 4
      %s59 = int_to_ptr.hbm [resolvable:$true] %s58
      %61 = dma.vmem_to_hbm [thread:$0]  %s57, 64, %s59, [#allocation4]
    $region21: #{tpu_custom_call.1} parent=1 // pred_fallthru
      _
    // Predicated region
    $region22: #{tpu_custom_call.1} parent=1 // pred_check
      _
    $region23: #{tpu_custom_call.1} parent=1 // pred_check_branch
      %63 = sbr.rel (0) target = $region25
    $region24: #{tpu_custom_call.1} parent=1 // pred_region
      %65 = dma.done [#allocation4], 64
    $region25: #{tpu_custom_call.1} parent=1 // pred_fallthru
      _
    %66 = vsyncpa [#allocation3], 1
    %67 = vsyncpa [#allocation6], 1
    %68 = vsyncpa [#allocation4], 1

</llo_original>
